<compile_context>
chip_gen: v5e
topology: v5e:2x2
jax: 0.10.0
libtpu: 0.0.40
codegen_flags: <defaults>
</compile_context>

<pallas_src>
import math
import functools

import jax
import jax.numpy as jnp
from jax import lax
from jax.experimental import pallas as pl
from jax.experimental.pallas import tpu as pltpu


_NSEM = 8  # max outstanding gather DMAs per tile


def _round_up(x, m):
    return (x + m - 1) // m * m


def _emb_pe_ln_kernel(ids_ref, wemb_hbm, pe_ref, gamma_ref, beta_ref, out_ref,
                      rows_ref, sem_ref, *, tile, eps):
    """One grid step == one tile of `tile` tokens.

    Gathers `tile` embedding rows from HBM with up to _NSEM overlapped DMAs,
    adds the precomputed PE tile, LayerNorms over the feature dim.
    """
    t = pl.program_id(0)
    base = t * tile

    def _start(r):
        pltpu.make_async_copy(
            wemb_hbm.at[ids_ref[base + r]],      # (E,) row of the table in HBM
            rows_ref.at[r],                      # (E,) row of the VMEM scratch
            sem_ref.at[lax.rem(r, _NSEM)],
        ).start()

    def _wait(r):
        # src index is irrelevant for wait(); only dst/sem (byte count) matter.
        pltpu.make_async_copy(
            wemb_hbm.at[0],
            rows_ref.at[r],
            sem_ref.at[lax.rem(r, _NSEM)],
        ).wait()

    n_pre = min(_NSEM, tile)

    @pl.loop(0, n_pre)
    def _(r):
        _start(r)

    if tile > _NSEM:
        @pl.loop(_NSEM, tile)
        def _(r):
            _wait(r - _NSEM)   # free the semaphore slot we are about to reuse
            _start(r)

    @pl.loop(tile - n_pre, tile)
    def _(r):
        _wait(r)

    # words + positional encoding, then LayerNorm over the last dim.
    x = rows_ref[...] + pe_ref[...]                       # (tile, E) f32
    u = jnp.mean(x, axis=-1, keepdims=True)
    d = x - u
    s = jnp.mean(d * d, axis=-1, keepdims=True)
    xn = d * lax.rsqrt(s + eps)
    out_ref[...] = gamma_ref[...] * xn + beta_ref[...]


def embeddings_add_sin_cos_position(input_dp, word_emb, gamma, beta,
                                    eps=1e-12, max_tile=256):
    """input_dp: [B, S] int ids; word_emb: [V, E] f32; gamma/beta: [E] f32."""
    B, S = input_dp.shape
    V, E = word_emb.shape
    assert E % 2 == 0, "emb_size must be even for interleaved sin/cos PE"

    N = B * S
    tile = min(max_tile, _round_up(N, 8))      # multiple of 8 (sublane-dense)
    n_pad = _round_up(N, tile)

    # Token ids (scalar prefetch -> SMEM); pad with id 0 (in-bounds, discarded).
    ids = jnp.pad(input_dp.reshape(-1).astype(jnp.int32), (0, n_pad - N))

    # Precompute the sinusoidal PE table once in pure XLA: [S, E] -> per-token.
    pos = jnp.arange(S, dtype=jnp.float32)[:, None]                      # [S,1]
    div = jnp.exp(jnp.arange(0, E, 2, dtype=jnp.float32)
                  * (-math.log(10000.0) / E))                            # [E/2]
    ang = pos * div[None, :]                                             # [S,E/2]
    pe = jnp.zeros((S, E), jnp.float32)
    pe = pe.at[:, 0::2].set(jnp.sin(ang))
    pe = pe.at[:, 1::2].set(jnp.cos(ang))
    pe_tok = jnp.pad(jnp.tile(pe, (B, 1)), ((0, n_pad - N), (0, 0)))     # [n_pad,E]

    wemb = word_emb.astype(jnp.float32)
    gamma2 = gamma.reshape(1, E).astype(jnp.float32)
    beta2 = beta.reshape(1, E).astype(jnp.float32)

    kernel = functools.partial(_emb_pe_ln_kernel, tile=tile, eps=eps)

    cost = pl.CostEstimate(
        flops=8 * n_pad * E,
        transcendentals=n_pad,                         # rsqrt per token row
        bytes_accessed=3 * n_pad * E * 4 + n_pad * 4)  # gather + PE + out + ids

    out = pl.pallas_call(
        kernel,
        out_shape=jax.ShapeDtypeStruct((n_pad, E), jnp.float32),
        grid_spec=pltpu.PrefetchScalarGridSpec(
            num_scalar_prefetch=1,
            grid=(n_pad // tile,),
            in_specs=[
                pl.BlockSpec(memory_space=pl.ANY),               # emb table stays in HBM
                pl.BlockSpec((tile, E), lambda t, ids: (t, 0)),  # PE tile (pipelined)
                pl.BlockSpec((1, E), lambda t, ids: (0, 0)),     # gamma
                pl.BlockSpec((1, E), lambda t, ids: (0, 0)),     # beta
            ],
            out_specs=pl.BlockSpec((tile, E), lambda t, ids: (t, 0)),
            scratch_shapes=[
                pltpu.VMEM((tile, E), jnp.float32),              # gathered rows
                pltpu.SemaphoreType.DMA((_NSEM,)),
            ],
        ),
        compiler_params=pltpu.CompilerParams(
            dimension_semantics=("parallel",)),
        cost_estimate=cost,
    )(ids, wemb, pe_tok, gamma2, beta2)

    return out[:N].reshape(B, S, E)


def _reference(input_dp, word_emb, gamma, beta, eps=1e-12):
    """Pure-JAX reference mirroring the PyTorch forward (eval mode)."""
    B, S = input_dp.shape
    E = word_emb.shape[1]
    words = word_emb[input_dp]                               # [B, S, E]
    pos = jnp.arange(S, dtype=jnp.float32)[None, :, None]    # [1, S, 1]
    div = jnp.exp(jnp.arange(0.0, E, 2.0) * -(math.log(10000.0) / E))
    pe = jnp.zeros((B, S, E), jnp.float32)
    pe = pe.at[..., 0::2].set(jnp.sin(pos * div))
    pe = pe.at[..., 1::2].set(jnp.cos(pos * div))
    x = words + pe
    u = x.mean(-1, keepdims=True)
    s = ((x - u) ** 2).mean(-1, keepdims=True)
    x = (x - u) / jnp.sqrt(s + eps)
    return gamma * x + beta


if __name__ == "__main__":
    B, S = 2, 8
    vocab_size, emb_size, max_size = 50, 32, 64

    key = jax.random.PRNGKey(0)
    k_ids, k_emb = jax.random.split(key)

    input_dp = jax.random.randint(k_ids, (B, S), 0, vocab_size, dtype=jnp.int32)
    # nn.Embedding ~ N(0,1); LayerNorm gamma=1, beta=0.
    word_emb = jax.random.normal(k_emb, (vocab_size, emb_size), dtype=jnp.float32)
    gamma = jnp.ones((emb_size,), jnp.float32)
    beta = jnp.zeros((emb_size,), jnp.float32)
    # (position_embeddings from __init__ is unused in forward, so it is omitted.)

    out = embeddings_add_sin_cos_position(input_dp, word_emb, gamma, beta)
    out = jax.block_until_ready(out)

    ref = _reference(input_dp, word_emb, gamma, beta)
    assert out.shape == (B, S, emb_size)
    assert jnp.allclose(out, ref, atol=1e-5, rtol=1e-5), "mismatch vs JAX reference"

    print("KERNEL_OK")
</pallas_src>

<mosaic_0001>
module attributes {stable_mosaic.version = 11 : i64} {
  func.func @_emb_pe_ln_kernel(%arg0: i32, %arg1: memref<16xi32, #tpu.memory_space<smem>>, %arg2: memref<50x32xf32, #tpu.memory_space<any>>, %arg3: memref<16x32xf32, #tpu.memory_space<vmem>>, %arg4: memref<1x32xf32, #tpu.memory_space<vmem>>, %arg5: memref<1x32xf32, #tpu.memory_space<vmem>>, %arg6: memref<16x32xf32, #tpu.memory_space<vmem>>, %arg7: memref<16x32xf32, #tpu.memory_space<vmem>>, %arg8: memref<8x!tpu.dma_semaphore, #tpu.memory_space<semaphore_mem>>) attributes {dimension_semantics = [#tpu.dimension_semantics<parallel>], iteration_bounds = array<i64: 1>, scalar_prefetch = 1 : i64, scratch_operands = 2 : i64, tpu.core_type = #tpu.core_type<tc>, window_params = [{}, {transform_indices = @transform_1, window_bounds = array<i64: 16, 32>}, {pipeline_mode = #tpu.pipeline_mode<synchronous>, transform_indices = @transform_2, window_bounds = array<i64: 1, 32>}, {pipeline_mode = #tpu.pipeline_mode<synchronous>, transform_indices = @transform_3, window_bounds = array<i64: 1, 32>}, {transform_indices = @transform_4, window_bounds = array<i64: 16, 32>}]} {
    %c16_i32 = arith.constant 16 : i32
    %0 = arith.muli %arg0, %c16_i32 : i32
    %c0_i32 = arith.constant 0 : i32
    %c8_i32 = arith.constant 8 : i32
    %1 = arith.addi %c0_i32, %c8_i32 : i32
    %c1_i32 = arith.constant 1 : i32
    scf.for %arg9 = %c0_i32 to %1 step %c1_i32  : i32 {
      %c1_i32_22 = arith.constant 1 : i32
      %30 = arith.muli %arg9, %c1_i32_22 : i32
      %c0_i32_23 = arith.constant 0 : i32
      %31 = arith.addi %c0_i32_23, %30 : i32
      %32 = arith.addi %0, %31 : i32
      %33 = arith.index_cast %32 : i32 to index
      %34 = memref.load %arg1[%33] : memref<16xi32, #tpu.memory_space<smem>>
      %c8_i32_24 = arith.constant 8 : i32
      %35 = arith.remsi %31, %c8_i32_24 : i32
      %c0_i32_25 = arith.constant 0 : i32
      %36 = tpu.memref_slice %arg2[%34, %c0_i32_25] : memref<50x32xf32, #tpu.memory_space<any>> -> memref<1x32xf32, #tpu.memory_space<any>>
      %37 = tpu.memref_squeeze %36 : memref<1x32xf32, #tpu.memory_space<any>> -> memref<32xf32, #tpu.memory_space<any>>
      %c0_i32_26 = arith.constant 0 : i32
      %38 = tpu.memref_slice %arg7[%31, %c0_i32_26] : memref<16x32xf32, #tpu.memory_space<vmem>> -> memref<1x32xf32, #tpu.memory_space<vmem>>
      %39 = tpu.memref_squeeze %38 : memref<1x32xf32, #tpu.memory_space<vmem>> -> memref<32xf32, #tpu.memory_space<vmem>>
      %40 = tpu.memref_slice %arg8[%35] : memref<8x!tpu.dma_semaphore, #tpu.memory_space<semaphore_mem>> -> memref<1x!tpu.dma_semaphore, #tpu.memory_space<semaphore_mem>>
      %41 = tpu.memref_squeeze %40 : memref<1x!tpu.dma_semaphore, #tpu.memory_space<semaphore_mem>> -> memref<!tpu.dma_semaphore, #tpu.memory_space<semaphore_mem>>
      tpu.enqueue_dma source(%37 : memref<32xf32, #tpu.memory_space<any>>) target(%39 : memref<32xf32, #tpu.memory_space<vmem>>) target_semaphore(%41 : memref<!tpu.dma_semaphore, #tpu.memory_space<semaphore_mem>>)
    }
    %c8_i32_0 = arith.constant 8 : i32
    %c0_i32_1 = arith.constant 0 : i32
    %c8_i32_2 = arith.constant 8 : i32
    %2 = arith.addi %c0_i32_1, %c8_i32_2 : i32
    %c1_i32_3 = arith.constant 1 : i32
    scf.for %arg9 = %c0_i32_1 to %2 step %c1_i32_3  : i32 {
      %c1_i32_22 = arith.constant 1 : i32
      %30 = arith.muli %arg9, %c1_i32_22 : i32
      %c8_i32_23 = arith.constant 8 : i32
      %31 = arith.addi %c8_i32_23, %30 : i32
      %c8_i32_24 = arith.constant 8 : i32
      %32 = arith.subi %31, %c8_i32_24 : i32
      %c8_i32_25 = arith.constant 8 : i32
      %33 = arith.remsi %32, %c8_i32_25 : i32
      %c0_i32_26 = arith.constant 0 : i32
      %c0_i32_27 = arith.constant 0 : i32
      %34 = tpu.memref_slice %arg2[%c0_i32_26, %c0_i32_27] : memref<50x32xf32, #tpu.memory_space<any>> -> memref<1x32xf32, #tpu.memory_space<any>>
      %35 = tpu.memref_squeeze %34 : memref<1x32xf32, #tpu.memory_space<any>> -> memref<32xf32, #tpu.memory_space<any>>
      %c0_i32_28 = arith.constant 0 : i32
      %36 = tpu.memref_slice %arg7[%32, %c0_i32_28] : memref<16x32xf32, #tpu.memory_space<vmem>> -> memref<1x32xf32, #tpu.memory_space<vmem>>
      %37 = tpu.memref_squeeze %36 : memref<1x32xf32, #tpu.memory_space<vmem>> -> memref<32xf32, #tpu.memory_space<vmem>>
      %38 = tpu.memref_slice %arg8[%33] : memref<8x!tpu.dma_semaphore, #tpu.memory_space<semaphore_mem>> -> memref<1x!tpu.dma_semaphore, #tpu.memory_space<semaphore_mem>>
      %39 = tpu.memref_squeeze %38 : memref<1x!tpu.dma_semaphore, #tpu.memory_space<semaphore_mem>> -> memref<!tpu.dma_semaphore, #tpu.memory_space<semaphore_mem>>
      tpu.wait_dma2 semaphore(%39 : memref<!tpu.dma_semaphore, #tpu.memory_space<semaphore_mem>>) src(%35 : memref<32xf32, #tpu.memory_space<any>>) dst(%37 : memref<32xf32, #tpu.memory_space<vmem>>)
      %40 = arith.addi %0, %31 : i32
      %41 = arith.index_cast %40 : i32 to index
      %42 = memref.load %arg1[%41] : memref<16xi32, #tpu.memory_space<smem>>
      %c8_i32_29 = arith.constant 8 : i32
      %43 = arith.remsi %31, %c8_i32_29 : i32
      %c0_i32_30 = arith.constant 0 : i32
      %44 = tpu.memref_slice %arg2[%42, %c0_i32_30] : memref<50x32xf32, #tpu.memory_space<any>> -> memref<1x32xf32, #tpu.memory_space<any>>
      %45 = tpu.memref_squeeze %44 : memref<1x32xf32, #tpu.memory_space<any>> -> memref<32xf32, #tpu.memory_space<any>>
      %c0_i32_31 = arith.constant 0 : i32
      %46 = tpu.memref_slice %arg7[%31, %c0_i32_31] : memref<16x32xf32, #tpu.memory_space<vmem>> -> memref<1x32xf32, #tpu.memory_space<vmem>>
      %47 = tpu.memref_squeeze %46 : memref<1x32xf32, #tpu.memory_space<vmem>> -> memref<32xf32, #tpu.memory_space<vmem>>
      %48 = tpu.memref_slice %arg8[%43] : memref<8x!tpu.dma_semaphore, #tpu.memory_space<semaphore_mem>> -> memref<1x!tpu.dma_semaphore, #tpu.memory_space<semaphore_mem>>
      %49 = tpu.memref_squeeze %48 : memref<1x!tpu.dma_semaphore, #tpu.memory_space<semaphore_mem>> -> memref<!tpu.dma_semaphore, #tpu.memory_space<semaphore_mem>>
      tpu.enqueue_dma source(%45 : memref<32xf32, #tpu.memory_space<any>>) target(%47 : memref<32xf32, #tpu.memory_space<vmem>>) target_semaphore(%49 : memref<!tpu.dma_semaphore, #tpu.memory_space<semaphore_mem>>)
    }
    %c8_i32_4 = arith.constant 8 : i32
    %c0_i32_5 = arith.constant 0 : i32
    %c8_i32_6 = arith.constant 8 : i32
    %3 = arith.addi %c0_i32_5, %c8_i32_6 : i32
    %c1_i32_7 = arith.constant 1 : i32
    scf.for %arg9 = %c0_i32_5 to %3 step %c1_i32_7  : i32 {
      %c1_i32_22 = arith.constant 1 : i32
      %30 = arith.muli %arg9, %c1_i32_22 : i32
      %c8_i32_23 = arith.constant 8 : i32
      %31 = arith.addi %c8_i32_23, %30 : i32
      %c8_i32_24 = arith.constant 8 : i32
      %32 = arith.remsi %31, %c8_i32_24 : i32
      %c0_i32_25 = arith.constant 0 : i32
      %c0_i32_26 = arith.constant 0 : i32
      %33 = tpu.memref_slice %arg2[%c0_i32_25, %c0_i32_26] : memref<50x32xf32, #tpu.memory_space<any>> -> memref<1x32xf32, #tpu.memory_space<any>>
      %34 = tpu.memref_squeeze %33 : memref<1x32xf32, #tpu.memory_space<any>> -> memref<32xf32, #tpu.memory_space<any>>
      %c0_i32_27 = arith.constant 0 : i32
      %35 = tpu.memref_slice %arg7[%31, %c0_i32_27] : memref<16x32xf32, #tpu.memory_space<vmem>> -> memref<1x32xf32, #tpu.memory_space<vmem>>
      %36 = tpu.memref_squeeze %35 : memref<1x32xf32, #tpu.memory_space<vmem>> -> memref<32xf32, #tpu.memory_space<vmem>>
      %37 = tpu.memref_slice %arg8[%32] : memref<8x!tpu.dma_semaphore, #tpu.memory_space<semaphore_mem>> -> memref<1x!tpu.dma_semaphore, #tpu.memory_space<semaphore_mem>>
      %38 = tpu.memref_squeeze %37 : memref<1x!tpu.dma_semaphore, #tpu.memory_space<semaphore_mem>> -> memref<!tpu.dma_semaphore, #tpu.memory_space<semaphore_mem>>
      tpu.wait_dma2 semaphore(%38 : memref<!tpu.dma_semaphore, #tpu.memory_space<semaphore_mem>>) src(%34 : memref<32xf32, #tpu.memory_space<any>>) dst(%36 : memref<32xf32, #tpu.memory_space<vmem>>)
    }
    %c8_i32_8 = arith.constant 8 : i32
    %c0 = arith.constant 0 : index
    %c0_9 = arith.constant 0 : index
    %4 = vector.load %arg7[%c0, %c0_9] : memref<16x32xf32, #tpu.memory_space<vmem>>, vector<16x32xf32>
    %c0_10 = arith.constant 0 : index
    %c0_11 = arith.constant 0 : index
    %5 = vector.load %arg3[%c0_10, %c0_11] : memref<16x32xf32, #tpu.memory_space<vmem>>, vector<16x32xf32>
    %6 = arith.addf %4, %5 : vector<16x32xf32>
    %cst = arith.constant dense<0.000000e+00> : vector<16xf32>
    %7 = vector.multi_reduction <add>, %6, %cst [1] : vector<16x32xf32> to vector<16xf32>
    %8 = vector.shape_cast %7 : vector<16xf32> to vector<16x1xf32>
    %cst_12 = arith.constant 3.200000e+01 : f32
    %9 = vector.broadcast %cst_12 : f32 to vector<16x1xf32>
    %10 = arith.divf %8, %9 : vector<16x1xf32>
    %11 = vector.broadcast %10 : vector<16x1xf32> to vector<16x32xf32>
    %12 = arith.subf %6, %11 : vector<16x32xf32>
    %13 = arith.mulf %12, %12 : vector<16x32xf32>
    %cst_13 = arith.constant dense<0.000000e+00> : vector<16xf32>
    %14 = vector.multi_reduction <add>, %13, %cst_13 [1] : vector<16x32xf32> to vector<16xf32>
    %15 = vector.shape_cast %14 : vector<16xf32> to vector<16x1xf32>
    %cst_14 = arith.constant 3.200000e+01 : f32
    %16 = vector.broadcast %cst_14 : f32 to vector<16x1xf32>
    %17 = arith.divf %15, %16 : vector<16x1xf32>
    %cst_15 = arith.constant 9.99999996E-13 : f32
    %18 = vector.broadcast %cst_15 : f32 to vector<16x1xf32>
    %19 = arith.addf %17, %18 : vector<16x1xf32>
    %20 = math.rsqrt %19 : vector<16x1xf32>
    %21 = vector.broadcast %20 : vector<16x1xf32> to vector<16x32xf32>
    %22 = arith.mulf %12, %21 : vector<16x32xf32>
    %c0_16 = arith.constant 0 : index
    %c0_17 = arith.constant 0 : index
    %23 = vector.load %arg4[%c0_16, %c0_17] : memref<1x32xf32, #tpu.memory_space<vmem>>, vector<1x32xf32>
    %24 = vector.broadcast %23 : vector<1x32xf32> to vector<16x32xf32>
    %25 = arith.mulf %24, %22 : vector<16x32xf32>
    %c0_18 = arith.constant 0 : index
    %c0_19 = arith.constant 0 : index
    %26 = vector.load %arg5[%c0_18, %c0_19] : memref<1x32xf32, #tpu.memory_space<vmem>>, vector<1x32xf32>
    %27 = vector.broadcast %26 : vector<1x32xf32> to vector<16x32xf32>
    %28 = arith.addf %25, %27 : vector<16x32xf32>
    %c0_20 = arith.constant 0 : index
    %c0_21 = arith.constant 0 : index
    %29 = vector.load %arg6[%c0_20, %c0_21] : memref<16x32xf32, #tpu.memory_space<vmem>>, vector<16x32xf32>
    tpu.vector_store %arg6[%c0_20, %c0_21], %28 {strides = array<i32>} : memref<16x32xf32, #tpu.memory_space<vmem>>, vector<16x32xf32>,
    return
  }
  func.func @transform_1(%arg0: i32, %arg1: memref<16xi32, #tpu.memory_space<smem>>) -> (i32, i32) {
    %c0_i32 = arith.constant 0 : i32
    %c0_i32_0 = arith.constant 0 : i32
    return %arg0, %c0_i32 : i32, i32
  }
  func.func @transform_2(%arg0: i32, %arg1: memref<16xi32, #tpu.memory_space<smem>>) -> (i32, i32) {
    %c0_i32 = arith.constant 0 : i32
    %c0_i32_0 = arith.constant 0 : i32
    %c0_i32_1 = arith.constant 0 : i32
    return %c0_i32, %c0_i32_0 : i32, i32
  }
  func.func @transform_3(%arg0: i32, %arg1: memref<16xi32, #tpu.memory_space<smem>>) -> (i32, i32) {
    %c0_i32 = arith.constant 0 : i32
    %c0_i32_0 = arith.constant 0 : i32
    %c0_i32_1 = arith.constant 0 : i32
    return %c0_i32, %c0_i32_0 : i32, i32
  }
  func.func @transform_4(%arg0: i32, %arg1: memref<16xi32, #tpu.memory_space<smem>>) -> (i32, i32) {
    %c0_i32 = arith.constant 0 : i32
    %c0_i32_0 = arith.constant 0 : i32
    return %arg0, %c0_i32 : i32, i32
  }
}

</mosaic_0001>

<llo_original>
// kernel: tpu_custom_call.1
$region0: #{tpu_custom_call.1}
  #allocation0 [shape = 'u32[]', space=smem, size = 0x4, offset = 0x4, fixed_abs, tag = 'smem constant byte address 0x4 - core index']
  #allocation1 [shape = 'u32[72,128]{1,0:T(1,128)}', space=vmem, size = 0x9000, scoped, tag = 'internal scratch']
  #allocation2 [shape = 'f32[16,32]{1,0:T(8,128)}', space=vmem, size = 0x2000, scoped, tag = 'scratch operand']
  #allocation3 [shape = 's32[8]{0}', space=sflag, size = 0x20, scoped, tag = 'scratch operand']
  #allocation4 [shape = 's32[1]{0}', space=sflag, size = 0x4, scoped, tag = 'scoped memory for tpu_custom_call.1']
  #allocation5 [shape = 'u8[512]{0}', space=smem, size = 0x200, scoped, tag = 'prefetched SMEM operand 0']
  #allocation8 [shape = 's32[]', space=sflag, size = 0x4, offset = 0, fixed_abs, tag = 'sflag constant byte address 0x0 - dummy sync flag']
  #allocation9 [shape = 's32[]', space=sflag, size = 0x4, offset = 0, fixed_abs, tag = 'sflag constant byte address 0x0 - dummy sync flag']
  %s0 = inlined_call_operand.vmem [shape: s32[16], index: 0, kind: input, shape index: {}]
  %s1 = inlined_call_operand.vmem [shape: f32[50,32], index: 1, kind: input, shape index: {}]
  %s2 = inlined_call_operand.vmem [shape: f32[16,32], index: 2, kind: input, shape index: {}]
  %s3 = inlined_call_operand.vmem [shape: f32[1,32], index: 3, kind: input, shape index: {}]
  %s4 = inlined_call_operand.vmem [shape: f32[1,32], index: 4, kind: input, shape index: {}]
  %s5 = inlined_call_operand.hbm [shape: f32[16,32], index: 5, kind: output, shape index: {}]
  %s6 = sld [smem:[#allocation0]]
  $region103: #{tpu_custom_call.1} parent=0
    _
  %s8 = ssub.s32 1, %s6
  %s9 = scalar_select 0, %s8, %s6
  %s11 = sshll.u32 %s0, 4
  %s12 = int_to_ptr.vmem [resolvable:$true] %s11
  %14 = dma.vmem_to_smem %s12, 16, [#allocation5], [#allocation4]
  %16 = dma.done [#allocation4], 16
  %17 = sfence
  $region1: #{tpu_custom_call.1} parent=0
    #allocation6 [shape = 'u8[8192]{0}', space=vmem, size = 0x2000, scoped, tag = 'output window, operand 0, single buffered']
    #allocation7 [shape = 's32[1]{0}', space=sflag, size = 0x4, scoped, tag = 'scoped memory for tpu_custom_call.1']
    %18 = vsyncpa [#allocation7], 0
    // Predicated region
    $region2: #{tpu_custom_call.1} parent=1 // pred_check
      _
    $region3: #{tpu_custom_call.1} parent=1 // pred_check_branch
      %20 = sbr.rel (0) target = $region5
    $region4: #{tpu_custom_call.1} parent=1 // pred_region
      _
    $region5: #{tpu_custom_call.1} parent=1 // pred_fallthru
      _
    // Predicated region
    $region6: #{tpu_custom_call.1} parent=1 // pred_check
      _
    $region7: #{tpu_custom_call.1} parent=1 // pred_check_branch
      %22 = sbr.rel (0) target = $region9
    $region8: #{tpu_custom_call.1} parent=1 // pred_region
      _
    $region9: #{tpu_custom_call.1} parent=1 // pred_fallthru
      _
    // Predicated region
    $region10: #{tpu_custom_call.1} parent=1 // pred_check
      _
    $region11: #{tpu_custom_call.1} parent=1 // pred_check_branch
      %24 = sbr.rel (0) target = $region13
    $region12: #{tpu_custom_call.1} parent=1 // pred_region
      _
    $region13: #{tpu_custom_call.1} parent=1 // pred_fallthru
      _
    %s25 = smul.u32 0, 16
    loop: start=0, step=1, limit=8
    $region14: #{tpu_custom_call.1} parent=1 // loop_pre_header
      _
    $region15: #{tpu_custom_call.1} parent=1 // loop_header
      %s27 = sphi 0, %s31
      %p28 = scmp.ge.s32.totalorder %s27, 8
    $region16: #{tpu_custom_call.1} parent=1 // loop_header_branch
      %30 = sbr.rel (%p28) target = $region20
    $region17: #{tpu_custom_call.1} parent=1 // loop_body
      %s32 = sadd.s32 %s25, %s27
      %s33 = sld [smem:[#allocation5 + %s32]]
      %p34 = scmp.lt.s32.totalorder %s27, 0
      %s35 = ssub.s32 0, %s27
      %s36 = scalar_select %p34, %s35, %s27
      %s37 = sand.u32 %s36, 7
      %s38 = ssub.s32 0, %s37
      %s39 = scalar_select %p34, %s38, %s37
      %s40 = scalar_lea.vmem %s1, %s33
      %s41 = scalar_lea.vmem [#allocation2], %s27
      %s42 = scalar_lea.sflag [#allocation3], %s39
      // Predicated region
      $region21: #{tpu_custom_call.1} parent=17 // pred_check
        _
      $region22: #{tpu_custom_call.1} parent=17 // pred_check_branch
        %44 = sbr.rel target = $region24
      $region23: #{tpu_custom_call.1} parent=17 // pred_region
        // Predicated region
        $region36: #{tpu_custom_call.1} parent=23 // pred_check
          _
        $region37: #{tpu_custom_call.1} parent=23 // pred_check_branch
          %60 = sbr.rel (0) target = $region39
        $region38: #{tpu_custom_call.1} parent=23 // pred_region
          %s62 = ssub.s32 2, 1
          loop: start=0, step=1, limit=1
          $region40: #{tpu_custom_call.1} parent=38 // loop_pre_header
            _
          $region41: #{tpu_custom_call.1} parent=38 // loop_header
            %s64 = sphi 0, %s68
            %p65 = scmp.ge.s32.totalorder %s64, 1
            %s69 = sphi %s40, %s40
            %s70 = sphi %s41, %s41
          $region42: #{tpu_custom_call.1} parent=38 // loop_header_branch
            %67 = sbr.rel (%p65) target = $region46
          $region43: #{tpu_custom_call.1} parent=38 // loop_body
            %v71 = vld [vmem:[%s69] sm:%s62]
            %72 = vst [vmem:[%s70] sm:%s62] %v71
          $region44: #{tpu_custom_call.1} parent=38 // loop_footer
            %s68 = sadd.s32 1, %s64
          $region45: #{tpu_custom_call.1} parent=38 // loop_footer_branch
            %63 = sbr.rel target = $region41
          $region46: #{tpu_custom_call.1} parent=38 // loop_exit
            _
        $region39: #{tpu_custom_call.1} parent=23 // pred_fallthru
          _
      $region24: #{tpu_custom_call.1} parent=17 // pred_fallthru
        _
      // Predicated region
      $region25: #{tpu_custom_call.1} parent=17 // pred_check
        _
      $region26: #{tpu_custom_call.1} parent=17 // pred_check_branch
        %46 = sbr.rel (0) target = $region28
      $region27: #{tpu_custom_call.1} parent=17 // pred_region
        %s48 = ssub.s32 2, 1
        loop: start=0, step=1, limit=1
        $region29: #{tpu_custom_call.1} parent=27 // loop_pre_header
          _
        $region30: #{tpu_custom_call.1} parent=27 // loop_header
          %s50 = sphi 0, %s54
          %p51 = scmp.ge.s32.totalorder %s50, 1
          %s55 = sphi %s40, %s40
          %s56 = sphi %s41, %s41
        $region31: #{tpu_custom_call.1} parent=27 // loop_header_branch
          %53 = sbr.rel (%p51) target = $region35
        $region32: #{tpu_custom_call.1} parent=27 // loop_body
          %v57 = vld [vmem:[%s55] sm:%s48]
          %58 = vst [vmem:[%s56] sm:%s48] %v57
        $region33: #{tpu_custom_call.1} parent=27 // loop_footer
          %s54 = sadd.s32 1, %s50
        $region34: #{tpu_custom_call.1} parent=27 // loop_footer_branch
          %49 = sbr.rel target = $region30
        $region35: #{tpu_custom_call.1} parent=27 // loop_exit
          _
      $region28: #{tpu_custom_call.1} parent=17 // pred_fallthru
        _
      // Predicated region
      $region47: #{tpu_custom_call.1} parent=17 // pred_check
        _
      $region48: #{tpu_custom_call.1} parent=17 // pred_check_branch
        %75 = sbr.rel (0) target = $region50
      $region49: #{tpu_custom_call.1} parent=17 // pred_region
        %76 = vsyncadd %s42, 16
      $region50: #{tpu_custom_call.1} parent=17 // pred_fallthru
        _
    $region18: #{tpu_custom_call.1} parent=1 // loop_footer
      %s31 = sadd.s32 1, %s27
    $region19: #{tpu_custom_call.1} parent=1 // loop_footer_branch
      %26 = sbr.rel target = $region15
    $region20: #{tpu_custom_call.1} parent=1 // loop_exit
      _
    loop: start=0, step=1, limit=8
    $region51: #{tpu_custom_call.1} parent=1 // loop_pre_header
      _
    $region52: #{tpu_custom_call.1} parent=1 // loop_header
      %s78 = sphi 0, %s82
      %p79 = scmp.ge.s32.totalorder %s78, 8
    $region53: #{tpu_custom_call.1} parent=1 // loop_header_branch
      %81 = sbr.rel (%p79) target = $region57
    $region54: #{tpu_custom_call.1} parent=1 // loop_body
      %s83 = sadd.s32 %s78, 8
      %p84 = scmp.lt.s32.totalorder %s78, 0
      %s85 = ssub.s32 0, %s78
      %s86 = scalar_select %p84, %s85, %s78
      %s87 = sand.u32 %s86, 7
      %s88 = ssub.s32 0, %s87
      %s89 = scalar_select %p84, %s88, %s87
      %s90 = scalar_lea.sflag [#allocation3], %s89
      %92 = dma.done %s90, 16
      %s93 = sadd.s32 %s25, %s83
      %s94 = sld [smem:[#allocation5 + %s93]]
      %p95 = scmp.lt.s32.totalorder %s83, 0
      %s96 = ssub.s32 0, %s83
      %s97 = scalar_select %p95, %s96, %s83
      %s98 = sand.u32 %s97, 7
      %s99 = ssub.s32 0, %s98
      %s100 = scalar_select %p95, %s99, %s98
      %s101 = scalar_lea.vmem %s1, %s94
      %s102 = scalar_lea.vmem [#allocation2], %s83
      %s103 = scalar_lea.sflag [#allocation3], %s100
      // Predicated region
      $region58: #{tpu_custom_call.1} parent=54 // pred_check
        _
      $region59: #{tpu_custom_call.1} parent=54 // pred_check_branch
        %105 = sbr.rel target = $region61
      $region60: #{tpu_custom_call.1} parent=54 // pred_region
        // Predicated region
        $region73: #{tpu_custom_call.1} parent=60 // pred_check
          _
        $region74: #{tpu_custom_call.1} parent=60 // pred_check_branch
          %121 = sbr.rel (0) target = $region76
        $region75: #{tpu_custom_call.1} parent=60 // pred_region
          %s123 = ssub.s32 2, 1
          loop: start=0, step=1, limit=1
          $region77: #{tpu_custom_call.1} parent=75 // loop_pre_header
            _
          $region78: #{tpu_custom_call.1} parent=75 // loop_header
            %s125 = sphi 0, %s129
            %p126 = scmp.ge.s32.totalorder %s125, 1
            %s130 = sphi %s101, %s101
            %s131 = sphi %s102, %s102
          $region79: #{tpu_custom_call.1} parent=75 // loop_header_branch
            %128 = sbr.rel (%p126) target = $region83
          $region80: #{tpu_custom_call.1} parent=75 // loop_body
            %v132 = vld [vmem:[%s130] sm:%s123]
            %133 = vst [vmem:[%s131] sm:%s123] %v132
          $region81: #{tpu_custom_call.1} parent=75 // loop_footer
            %s129 = sadd.s32 1, %s125
          $region82: #{tpu_custom_call.1} parent=75 // loop_footer_branch
            %124 = sbr.rel target = $region78
          $region83: #{tpu_custom_call.1} parent=75 // loop_exit
            _
        $region76: #{tpu_custom_call.1} parent=60 // pred_fallthru
          _
      $region61: #{tpu_custom_call.1} parent=54 // pred_fallthru
        _
      // Predicated region
      $region62: #{tpu_custom_call.1} parent=54 // pred_check
        _
      $region63: #{tpu_custom_call.1} parent=54 // pred_check_branch
        %107 = sbr.rel (0) target = $region65
      $region64: #{tpu_custom_call.1} parent=54 // pred_region
        %s109 = ssub.s32 2, 1
        loop: start=0, step=1, limit=1
        $region66: #{tpu_custom_call.1} parent=64 // loop_pre_header
          _
        $region67: #{tpu_custom_call.1} parent=64 // loop_header
          %s111 = sphi 0, %s115
          %p112 = scmp.ge.s32.totalorder %s111, 1
          %s116 = sphi %s101, %s101
          %s117 = sphi %s102, %s102
        $region68: #{tpu_custom_call.1} parent=64 // loop_header_branch
          %114 = sbr.rel (%p112) target = $region72
        $region69: #{tpu_custom_call.1} parent=64 // loop_body
          %v118 = vld [vmem:[%s116] sm:%s109]
          %119 = vst [vmem:[%s117] sm:%s109] %v118
        $region70: #{tpu_custom_call.1} parent=64 // loop_footer
          %s115 = sadd.s32 1, %s111
        $region71: #{tpu_custom_call.1} parent=64 // loop_footer_branch
          %110 = sbr.rel target = $region67
        $region72: #{tpu_custom_call.1} parent=64 // loop_exit
          _
      $region65: #{tpu_custom_call.1} parent=54 // pred_fallthru
        _
      // Predicated region
      $region84: #{tpu_custom_call.1} parent=54 // pred_check
        _
      $region85: #{tpu_custom_call.1} parent=54 // pred_check_branch
        %136 = sbr.rel (0) target = $region87
      $region86: #{tpu_custom_call.1} parent=54 // pred_region
        %137 = vsyncadd %s103, 16
      $region87: #{tpu_custom_call.1} parent=54 // pred_fallthru
        _
    $region55: #{tpu_custom_call.1} parent=1 // loop_footer
      %s82 = sadd.s32 1, %s78
    $region56: #{tpu_custom_call.1} parent=1 // loop_footer_branch
      %77 = sbr.rel target = $region52
    $region57: #{tpu_custom_call.1} parent=1 // loop_exit
      _
    loop: start=0, step=1, limit=8
    $region88: #{tpu_custom_call.1} parent=1 // loop_pre_header
      _
    $region89: #{tpu_custom_call.1} parent=1 // loop_header
      %s139 = sphi 0, %s143
      %p140 = scmp.ge.s32.totalorder %s139, 8
    $region90: #{tpu_custom_call.1} parent=1 // loop_header_branch
      %142 = sbr.rel (%p140) target = $region94
    $region91: #{tpu_custom_call.1} parent=1 // loop_body
      %s144 = sadd.s32 %s139, 8
      %p145 = scmp.lt.s32.totalorder %s144, 0
      %s146 = ssub.s32 0, %s144
      %s147 = scalar_select %p145, %s146, %s144
      %s148 = sand.u32 %s147, 7
      %s149 = ssub.s32 0, %s148
      %s150 = scalar_select %p145, %s149, %s148
      %s151 = scalar_lea.sflag [#allocation3], %s150
      %153 = dma.done %s151, 16
    $region92: #{tpu_custom_call.1} parent=1 // loop_footer
      %s143 = sadd.s32 1, %s139
    $region93: #{tpu_custom_call.1} parent=1 // loop_footer_branch
      %138 = sbr.rel target = $region89
    $region94: #{tpu_custom_call.1} parent=1 // loop_exit
      _
    %v154 = vld [vmem:[#allocation2] sm:$0xff]
    %v155 = vld [vmem:[#allocation2 + $0x8] sm:$0xff]
    %v156 = vld [vmem:[%s2] sm:$0xff]
    %v157 = vld [vmem:[%s2 + $0x8] sm:$0xff]
    %v158 = vadd.f32 %v154, %v156
    %v159 = vadd.f32 %v155, %v157
    %vm160 = vcmask 261120
    %v161 = vsel %vm160, %v158, 0.0
    %162 = vadd.xlane.f32.xlu0 %v161
    %v163 = vpop.xlane.xlu0 %162
    %v164 = vsel %vm160, %v159, 0.0
    %165 = vadd.xlane.f32.xlu0 %v164
    %v166 = vpop.xlane.xlu0 %165
    %v167 = vrcp.pop 32.0
    %v168 = vmul.f32 32.0, %v167
    %v169 = vsub.f32 1.0, %v168
    %v170 = vmul.f32 %v167, %v169
    %v171 = vadd.f32 %v167, %v170
    %vm172 = vweird.f32 %v167
    %v173 = vsel %vm172, %v167, %v171
    %v174 = vmul.f32 %v163, %v173
    %v175 = vmul.f32 %v166, %v173
    %v176 = vsub.f32 %v158, %v174
    %v177 = vsub.f32 %v159, %v175
    %v178 = vmul.f32 %v176, %v176
    %v179 = vmul.f32 %v177, %v177
    %v180 = vsel %vm160, %v178, 0.0
    %181 = vadd.xlane.f32.xlu0 %v180
    %v182 = vpop.xlane.xlu0 %181
    %v183 = vsel %vm160, %v179, 0.0
    %184 = vadd.xlane.f32.xlu0 %v183
    %v185 = vpop.xlane.xlu0 %184
    %v186 = vmul.f32 %v182, %v173
    %v187 = vmul.f32 %v185, %v173
    %v188 = vadd.f32 %v186, 1e-12
    %v189 = vadd.f32 %v187, 1e-12
    %v190 = vrsqrt.pop %v188
    %v191 = vmul.f32 %v190, %v188
    %v192 = vmul.f32 %v191, %v190
    %v193 = vmul.f32 0.5, %v192
    %v194 = vsub.f32 1.5, %v193
    %v195 = vmul.f32 %v190, %v194
    %vm196 = vweird.f32 %v188
    %vm197 = vweird.f32 %v190
    %vm198 = vmor %vm196, %vm197
    %v199 = vsel %vm198, %v190, %v195
    %v200 = vrsqrt.pop %v189
    %v201 = vmul.f32 %v200, %v189
    %v202 = vmul.f32 %v201, %v200
    %v203 = vmul.f32 0.5, %v202
    %v204 = vsub.f32 1.5, %v203
    %v205 = vmul.f32 %v200, %v204
    %vm206 = vweird.f32 %v189
    %vm207 = vweird.f32 %v200
    %vm208 = vmor %vm206, %vm207
    %v209 = vsel %vm208, %v200, %v205
    %v210 = vmul.f32 %v176, %v199
    %v211 = vmul.f32 %v177, %v209
    %v212 = vld [vmem:[%s3] sm:$0x1]
    %v214 = vperm.slane %v212, 0
    %v216 = vmul.f32 %v214, %v210
    %v217 = vmul.f32 %v214, %v211
    %v218 = vld [vmem:[%s4] sm:$0x1]
    %v220 = vperm.slane %v218, 0
    %v222 = vadd.f32 %v216, %v220
    %v223 = vadd.f32 %v217, %v220
    %224 = vst.msk [vmem:[#allocation6] sm:$0xff] %vm160, %v222
    %225 = vst.msk [vmem:[#allocation6 + $0x8] sm:$0xff] %vm160, %v223
    // Predicated region
    $region95: #{tpu_custom_call.1} parent=1 // pred_check
      _
    $region96: #{tpu_custom_call.1} parent=1 // pred_check_branch
      %227 = sbr.rel (0) target = $region98
    $region97: #{tpu_custom_call.1} parent=1 // pred_region
      %229 = vsyncadd [#allocation7], 0
      %s230 = sshll.u32 [#allocation6], 4
      %s231 = int_to_ptr.vmem [resolvable:$true] %s230
      %s232 = sshll.u32 %s5, 4
      %s233 = int_to_ptr.hbm [resolvable:$true] %s232
      %238 = dma.vmem_to_hbm [thread:$0]  %s231, 256, %s233, [#allocation7], 128, 128, 8
    $region98: #{tpu_custom_call.1} parent=1 // pred_fallthru
      _
    // Predicated region
    $region99: #{tpu_custom_call.1} parent=1 // pred_check
      _
    $region100: #{tpu_custom_call.1} parent=1 // pred_check_branch
      %240 = sbr.rel (0) target = $region102
    $region101: #{tpu_custom_call.1} parent=1 // pred_region
      %242 = dma.done [#allocation7], 256
    $region102: #{tpu_custom_call.1} parent=1 // pred_fallthru
      _
    %243 = vsyncpa [#allocation7], 1
  %244 = vsyncmov [#allocation3]
  %s245 = vpop.sfrf %244
  %p246 = scmp.eq.s32.totalorder %s245, 0
  %p247 = pneg %p246
  %249 = shalt.err (%p247)
  %s250 = scalar_lea.sflag [#allocation3], 1
  %251 = vsyncmov %s250
  %s252 = vpop.sfrf %251
  %p253 = scmp.eq.s32.totalorder %s252, 0
  %p254 = pneg %p253
  %256 = shalt.err (%p254)
  %s257 = scalar_lea.sflag [#allocation3], 2
  %258 = vsyncmov %s257
  %s259 = vpop.sfrf %258
  %p260 = scmp.eq.s32.totalorder %s259, 0
  %p261 = pneg %p260
  %263 = shalt.err (%p261)
  %s264 = scalar_lea.sflag [#allocation3], 3
  %265 = vsyncmov %s264
  %s266 = vpop.sfrf %265
  %p267 = scmp.eq.s32.totalorder %s266, 0
  %p268 = pneg %p267
  %270 = shalt.err (%p268)
  %s271 = scalar_lea.sflag [#allocation3], 4
  %272 = vsyncmov %s271
  %s273 = vpop.sfrf %272
  %p274 = scmp.eq.s32.totalorder %s273, 0
  %p275 = pneg %p274
  %277 = shalt.err (%p275)
  %s278 = scalar_lea.sflag [#allocation3], 5
  %279 = vsyncmov %s278
  %s280 = vpop.sfrf %279
  %p281 = scmp.eq.s32.totalorder %s280, 0
  %p282 = pneg %p281
  %284 = shalt.err (%p282)
  %s285 = scalar_lea.sflag [#allocation3], 6
  %286 = vsyncmov %s285
  %s287 = vpop.sfrf %286
  %p288 = scmp.eq.s32.totalorder %s287, 0
  %p289 = pneg %p288
  %291 = shalt.err (%p289)
  %s292 = scalar_lea.sflag [#allocation3], 7
  %293 = vsyncmov %s292
  %s294 = vpop.sfrf %293
  %p295 = scmp.eq.s32.totalorder %s294, 0
  %p296 = pneg %p295
  %298 = shalt.err (%p296)

</llo_original>
